<compile_context>
chip_gen: v7x
topology: tpu7x:2x2x1
jax: 0.10.0
libtpu: 0.0.40
codegen_flags: <defaults>
</compile_context>

<pallas_src>
import jax
import jax.numpy as jnp
from jax.experimental import pallas as pl
from jax.experimental.pallas import tpu as pltpu


def _fused_conv1x1_tanh_kernel(w_ref, b_ref, x_ref, o_ref):
    # w_ref, b_ref: scalar parameters in SMEM (shape (1,))
    # x_ref, o_ref: (TR, L) tile in VMEM
    w = w_ref[0]
    b = b_ref[0]
    s = x_ref[...] * w + b          # 1x1 conv with 1 in / 1 out channel
    t = jnp.tanh(s)                 # t2 == u2 == v2
    o_ref[...] = s + t + t          # y2 = s2 + u2 + v2


def _launch(x2d, w_scalar, b_scalar):
    """Run the fused kernel over a lane-dense 2-D slab (rows, L)."""
    rows, L = x2d.shape

    # ~4 MiB f32 tiles: TR_max * L * 4 B = 4 MiB.
    TR_max = (4 * 1024 * 1024 // 4) // L          # multiple of 8 for L <= 2048
    if rows <= 8:
        TR = rows                                  # block == full row extent
    else:
        # Split rows so the grid has >= 2 blocks (feeds both v7x TCs),
        # rounded up to the sublane granule of 8.
        half8 = ((((rows + 1) // 2) + 7) // 8) * 8
        TR = max(8, min(TR_max, half8))

    grid = (pl.cdiv(rows, TR),)                    # partial edge block is OK
    elems = rows * L

    return pl.pallas_call(
        _fused_conv1x1_tanh_kernel,
        out_shape=jax.ShapeDtypeStruct(x2d.shape, x2d.dtype),
        grid=grid,
        in_specs=[
            pl.BlockSpec(memory_space=pltpu.SMEM),            # weight scalar
            pl.BlockSpec(memory_space=pltpu.SMEM),            # bias scalar
            pl.BlockSpec((TR, L), lambda i: (i, 0)),          # input tile
        ],
        out_specs=pl.BlockSpec((TR, L), lambda i: (i, 0)),    # output tile
        compiler_params=pltpu.CompilerParams(
            dimension_semantics=("parallel",),
            vmem_limit_bytes=32 * 1024 * 1024,                # 2x(in+out) tiles << 32 MiB
        ),
        cost_estimate=pl.CostEstimate(
            flops=4 * elems,
            transcendentals=elems,
            bytes_accessed=8 * elems,
        ),
    )(w_scalar, b_scalar, x2d)


def model_forward(x_nchw, weight, bias):
    """x_nchw: (N, 1, H, W) float32. weight: conv weight (1,1,1,1). bias: (1,)."""
    N, C, H, W = x_nchw.shape
    assert C == 1, "Conv2d(1, 1, 1) expects a single input channel"
    total = N * C * H * W

    w_scalar = jnp.reshape(weight, (1,)).astype(x_nchw.dtype)
    b_scalar = jnp.reshape(bias, (1,)).astype(x_nchw.dtype)
    flat = x_nchw.reshape(total)                  # metadata-only on contiguous NCHW

    # Widest lane width that divides total -> zero-copy reshape, no wrapper pad.
    L = None
    for cand in (2048, 1024, 512, 256, 128):
        if total % cand == 0:
            L = cand
            break

    if L is not None:
        out2d = _launch(flat.reshape(total // L, L), w_scalar, b_scalar)
        return out2d.reshape(N, C, H, W)

    # Rare fallback: total not a multiple of 128 -> minimal pad (< 128 elems).
    L = 128
    total_pad = ((total + L - 1) // L) * L
    flat_p = jnp.pad(flat, (0, total_pad - total))
    out2d = _launch(flat_p.reshape(total_pad // L, L), w_scalar, b_scalar)
    return out2d.reshape(total_pad)[:total].reshape(N, C, H, W)


if __name__ == "__main__":
    key = jax.random.PRNGKey(0)
    k_x, k_w, k_b = jax.random.split(key, 3)

    # Small NCHW input consistent with Conv2d(1, 1, 1): in_channels must be 1.
    x = jax.random.normal(k_x, (2, 1, 16, 16), dtype=jnp.float32)

    # Deterministic parameter init (PyTorch Conv2d default: U(-1, 1) since fan_in=1).
    weight = jax.random.uniform(k_w, (1, 1, 1, 1), minval=-1.0, maxval=1.0,
                                dtype=jnp.float32)
    bias = jax.random.uniform(k_b, (1,), minval=-1.0, maxval=1.0,
                              dtype=jnp.float32)

    y = model_forward(x, weight, bias)
    jax.block_until_ready(y)

    # Reference check in plain JAX.
    s_ref = x * weight.reshape(()) + bias.reshape(())
    y_ref = s_ref + 2.0 * jnp.tanh(s_ref)
    assert y.shape == x.shape
    assert jnp.allclose(y, y_ref, atol=1e-6, rtol=1e-6), "mismatch vs reference"

    print("KERNEL_OK")
</pallas_src>

<mosaic_0001>
module attributes {stable_mosaic.version = 11 : i64} {
  func.func @_fused_conv1x1_tanh_kernel(%arg0: i32, %arg1: memref<1xf32, #tpu.memory_space<smem>>, %arg2: memref<1xf32, #tpu.memory_space<smem>>, %arg3: memref<1x512xf32, #tpu.memory_space<vmem>>, %arg4: memref<1x512xf32, #tpu.memory_space<vmem>>) attributes {dimension_semantics = [#tpu.dimension_semantics<parallel>], iteration_bounds = array<i64: 1>, scalar_prefetch = 0 : i64, scratch_operands = 0 : i64, tpu.core_type = #tpu.core_type<tc>, window_params = [{transform_indices = @transform_0, window_bounds = array<i64: 1>}, {transform_indices = @transform_1, window_bounds = array<i64: 1>}, {transform_indices = @transform_2, window_bounds = array<i64: 1, 512>}, {transform_indices = @transform_3, window_bounds = array<i64: 1, 512>}]} {
    %c0 = arith.constant 0 : index
    %0 = memref.load %arg1[%c0] : memref<1xf32, #tpu.memory_space<smem>>
    %c0_0 = arith.constant 0 : index
    %1 = memref.load %arg2[%c0_0] : memref<1xf32, #tpu.memory_space<smem>>
    %c0_1 = arith.constant 0 : index
    %c0_2 = arith.constant 0 : index
    %2 = vector.load %arg3[%c0_1, %c0_2] : memref<1x512xf32, #tpu.memory_space<vmem>>, vector<1x512xf32>
    %3 = vector.broadcast %0 : f32 to vector<1x512xf32>
    %4 = arith.mulf %2, %3 : vector<1x512xf32>
    %5 = vector.broadcast %1 : f32 to vector<1x512xf32>
    %6 = arith.addf %4, %5 : vector<1x512xf32>
    %7 = math.tanh %6 : vector<1x512xf32>
    %8 = arith.addf %6, %7 : vector<1x512xf32>
    %9 = arith.addf %8, %7 : vector<1x512xf32>
    %c0_3 = arith.constant 0 : index
    %c0_4 = arith.constant 0 : index
    %10 = vector.load %arg4[%c0_3, %c0_4] : memref<1x512xf32, #tpu.memory_space<vmem>>, vector<1x512xf32>
    tpu.vector_store %arg4[%c0_3, %c0_4], %9 {strides = array<i32>} : memref<1x512xf32, #tpu.memory_space<vmem>>, vector<1x512xf32>,
    return
  }
  func.func @transform_0(%arg0: i32) -> i32 {
    %c0_i32 = arith.constant 0 : i32
    %c0_i32_0 = arith.constant 0 : i32
    return %c0_i32 : i32
  }
  func.func @transform_1(%arg0: i32) -> i32 {
    %c0_i32 = arith.constant 0 : i32
    %c0_i32_0 = arith.constant 0 : i32
    return %c0_i32 : i32
  }
  func.func @transform_2(%arg0: i32) -> (i32, i32) {
    %c0_i32 = arith.constant 0 : i32
    %c0_i32_0 = arith.constant 0 : i32
    return %arg0, %c0_i32 : i32, i32
  }
  func.func @transform_3(%arg0: i32) -> (i32, i32) {
    %c0_i32 = arith.constant 0 : i32
    %c0_i32_0 = arith.constant 0 : i32
    return %arg0, %c0_i32 : i32, i32
  }
}

</mosaic_0001>

<llo_original>
// kernel: tpu_custom_call.1
$region0: #{tpu_custom_call.1}
  #allocation0 [shape = 'u32[]', space=smem, size = 0x4, offset = 0x4, fixed_abs, tag = 'smem constant byte address 0x4 - core index']
  #allocation1 [shape = 'u32[144,128]{1,0:T(1,128)}', space=vmem, size = 0x12000, scoped, tag = 'internal scratch']
  #allocation2 [shape = 'f32[1]{0:T(128)S(6)}', space=smem, size = 0x200, scoped, tag = 'scoped memory for tpu_custom_call.1']
  #allocation3 [shape = 'f32[1]{0:T(128)S(6)}', space=smem, size = 0x200, scoped, tag = 'scoped memory for tpu_custom_call.1']
  %s0 = inlined_call_operand.<no memory space> [shape: f32[1], index: 0, kind: input, shape index: {}]
  %s1 = inlined_call_operand.<no memory space> [shape: f32[1], index: 1, kind: input, shape index: {}]
  %s2 = inlined_call_operand.vmem [shape: f32[1,512], index: 2, kind: input, shape index: {}]
  %s3 = inlined_call_operand.hbm [shape: f32[1,512], index: 3, kind: output, shape index: {}]
  %s4 = sld [smem:[#allocation0]]
  $region22: #{tpu_custom_call.1} parent=0
    _
  %s6 = ssub.s32 1, %s4
  %s7 = scalar_select 0, %s6, %s4
  %8 = sst [smem:[#allocation2]] %s0
  %9 = sst [smem:[#allocation3]] %s1
  $region1: #{tpu_custom_call.1} parent=0
    #allocation4 [shape = 'u8[2048]{0}', space=vmem, size = 0x800, scoped, tag = 'output window, operand 0, single buffered']
    #allocation5 [shape = 's32[1]{0}', space=sflag, size = 0x4, scoped, tag = 'scoped memory for tpu_custom_call.1']
    %10 = vsyncpa [#allocation5], 0
    // Predicated region
    $region2: #{tpu_custom_call.1} parent=1 // pred_check
      _
    $region3: #{tpu_custom_call.1} parent=1 // pred_check_branch
      %12 = sbr.rel (0) target = $region5
    $region4: #{tpu_custom_call.1} parent=1 // pred_region
      _
    $region5: #{tpu_custom_call.1} parent=1 // pred_fallthru
      _
    // Predicated region
    $region6: #{tpu_custom_call.1} parent=1 // pred_check
      _
    $region7: #{tpu_custom_call.1} parent=1 // pred_check_branch
      %14 = sbr.rel (0) target = $region9
    $region8: #{tpu_custom_call.1} parent=1 // pred_region
      _
    $region9: #{tpu_custom_call.1} parent=1 // pred_fallthru
      _
    // Predicated region
    $region10: #{tpu_custom_call.1} parent=1 // pred_check
      _
    $region11: #{tpu_custom_call.1} parent=1 // pred_check_branch
      %16 = sbr.rel (0) target = $region13
    $region12: #{tpu_custom_call.1} parent=1 // pred_region
      _
    $region13: #{tpu_custom_call.1} parent=1 // pred_fallthru
      _
    %s17 = sld [smem:[#allocation2]]
    %s18 = sld [smem:[#allocation3]]
    %v19 = vld [vmem:[%s2] sm:$0xf]
    %v20 = vstv %s17
    %v21 = vmul.f32 %v19, %v20
    %v22 = vstv %s18
    %v23 = vadd.f32 %v21, %v22
    %v24 = vtanh.pop %v23
    %v25 = vadd.f32 %v23, %v24
    %v26 = vadd.f32 %v25, %v24
    %v27 = vlaneseq
    %vm28 = vcmp.ge.s32.totalorder %v27, 0
    %vm29 = vcmp.lt.s32.totalorder %v27, 512
    %vm30 = vmand %vm28, %vm29
    %31 = vst.msk [vmem:[#allocation4] sm:$0xf] %vm30, %v26
    // Predicated region
    $region14: #{tpu_custom_call.1} parent=1 // pred_check
      _
    $region15: #{tpu_custom_call.1} parent=1 // pred_check_branch
      %33 = sbr.rel (0) target = $region17
    $region16: #{tpu_custom_call.1} parent=1 // pred_region
      %s35 = ssub.s32 64, 64
      %36 = vsyncadd [#allocation5], %s35
      %s38 = sshll.u32 [#allocation4], 4
      %s39 = int_to_ptr.vmem [resolvable:$true] %s38
      %41 = dma.vmem_to_hbm [thread:$0]  %s39, 64, %s3, [#allocation5]
    $region17: #{tpu_custom_call.1} parent=1 // pred_fallthru
      _
    // Predicated region
    $region18: #{tpu_custom_call.1} parent=1 // pred_check
      _
    $region19: #{tpu_custom_call.1} parent=1 // pred_check_branch
      %43 = sbr.rel (0) target = $region21
    $region20: #{tpu_custom_call.1} parent=1 // pred_region
      %44 = dma.done [#allocation5], 64
    $region21: #{tpu_custom_call.1} parent=1 // pred_fallthru
      _
    %45 = vsyncpa [#allocation5], 1

</llo_original>
